<compile_context>
chip_gen: v7x
topology: tpu7x:2x2x1
jax: 0.10.0
libtpu: 0.0.40
codegen_flags: <defaults>
</compile_context>

<pallas_src>
import jax
import jax.numpy as jnp
from jax.experimental import pallas as pl
from jax.experimental.pallas import tpu as pltpu

OUT_PAD_SUB = 8  # fc3 output rows padded to one f32 sublane tile (real out_dim = 2)


def _round_up(n, m):
    return ((n + m - 1) // m) * m


def qnet_kernel(xt_ref, w1t_ref, b1t_ref, w2t_ref, b2t_ref, w3t_ref, b3t_ref,
                ot_ref):
    xt = xt_ref[...]                       # (2, TB)   f32, batch on lanes
    w1t = w1t_ref[...]                     # (64, 2)   f32

    # fc1 + ReLU on the VPU (contraction depth 2): lane-broadcast w1 columns
    # times sublane-broadcast x rows.  Keeps the MXU slot free for fc2/fc3.
    h1 = (w1t[:, 0:1] * xt[0:1, :] +
          w1t[:, 1:2] * xt[1:2, :] + b1t_ref[...])      # (64, TB) f32
    h1 = jnp.maximum(h1, 0.0)

    # fc2 + ReLU: bf16 MXU matmul, f32 accumulate / elementwise.
    h2 = jnp.dot(w2t_ref[...], h1.astype(jnp.bfloat16),
                 preferred_element_type=jnp.float32)    # (64, TB) f32
    h2 = jnp.maximum(h2 + b2t_ref[...], 0.0)

    # fc3 (no activation): (8, 64) @ (64, TB) on the MXU.
    out = jnp.dot(w3t_ref[...], h2.astype(jnp.bfloat16),
                  preferred_element_type=jnp.float32)   # (8, TB) f32
    ot_ref[...] = (out + b3t_ref[...]).astype(ot_ref.dtype)


def prepare_params(params):
    """One-time weight prep, hoisted out of the forward hot path.

    Transposes to the (out_features, in_features) layout used by the kernel,
    pads fc3 to 8 sublane rows, and casts the MXU operands to bf16.
    """
    w1, b1 = params["w1"], params["b1"]      # (2, 64),  (1, 64)
    w2, b2 = params["w2"], params["b2"]      # (64, 64), (1, 64)
    w3, b3 = params["w3"], params["b3"]      # (64, 2),  (1, 2)
    out_dim = w3.shape[1]
    w3t = jnp.zeros((OUT_PAD_SUB, w3.shape[0]), w3.dtype).at[:out_dim, :].set(w3.T)
    b3t = jnp.zeros((OUT_PAD_SUB, 1), b3.dtype).at[:out_dim, :].set(b3.T)
    return {
        "w1t": w1.T,                          # (64, 2)  f32
        "b1t": b1.T,                          # (64, 1)  f32
        "w2t": w2.T.astype(jnp.bfloat16),     # (64, 64) bf16
        "b2t": b2.T,                          # (64, 1)  f32
        "w3t": w3t.astype(jnp.bfloat16),      # (8, 64)  bf16
        "b3t": b3t,                           # (8, 1)   f32
        "out_dim": out_dim,
    }


def qnetwork_forward(x, prepped, tile_b=8192):
    """x: (B, 2) float32. prepped: output of prepare_params(). Returns (B, 2) f32."""
    B, f_in = x.shape
    out_dim = prepped["out_dim"]

    # Batch tile: multiple of 128 (lane granularity), capped so mid-size
    # batches still produce >= 2 grid steps (both v7x TensorCores get work).
    tb = min(tile_b, max(128, _round_up(pl.cdiv(B, 2), 128)))
    padded_b = _round_up(B, tb)
    grid = (padded_b // tb,)

    # Batch on lanes: x^T is (2, padded_b).  The transpose/pad is one tiny XLA
    # op over B*2 f32; padded lanes carry zeros and are sliced off below.
    xt = x.T
    if padded_b != B:
        xt = jnp.pad(xt, ((0, 0), (0, padded_b - B)))

    # Weights/biases: same block every grid step -> VMEM-resident.
    resident = lambda a: pl.BlockSpec(a.shape, lambda i: (0, 0))
    w1t, b1t = prepped["w1t"], prepped["b1t"]
    w2t, b2t = prepped["w2t"], prepped["b2t"]
    w3t, b3t = prepped["w3t"], prepped["b3t"]

    out_t = pl.pallas_call(
        qnet_kernel,
        out_shape=jax.ShapeDtypeStruct((OUT_PAD_SUB, padded_b), jnp.float32),
        grid=grid,
        in_specs=[
            pl.BlockSpec((f_in, tb), lambda i: (0, i)),   # x^T tiled over lanes
            resident(w1t), resident(b1t),
            resident(w2t), resident(b2t),
            resident(w3t), resident(b3t),
        ],
        out_specs=pl.BlockSpec((OUT_PAD_SUB, tb), lambda i: (0, i)),
        compiler_params=pltpu.CompilerParams(
            dimension_semantics=("parallel",),            # megacore sharding on v7x
            vmem_limit_bytes=32 * 1024 * 1024),
    )(xt, w1t, b1t, w2t, b2t, w3t, b3t)

    # (8, padded_B) -> (B, out_dim): tiny slice + transpose in the wrapper.
    return out_t[:out_dim, :B].T


def init_params(key):
    """Deterministic init mimicking PyTorch nn.Linear default (uniform +/- 1/sqrt(fan_in))."""
    dims = [(2, 64), (64, 64), (64, 2)]
    params = {}
    keys = jax.random.split(key, 2 * len(dims))
    for i, (fan_in, fan_out) in enumerate(dims):
        bound = 1.0 / jnp.sqrt(fan_in)
        w = jax.random.uniform(keys[2 * i], (fan_in, fan_out),
                               minval=-bound, maxval=bound, dtype=jnp.float32)
        b = jax.random.uniform(keys[2 * i + 1], (1, fan_out),
                               minval=-bound, maxval=bound, dtype=jnp.float32)
        params[f"w{i+1}"] = w
        params[f"b{i+1}"] = b
    return params


def reference_forward(x, p):
    h1 = jnp.maximum(x @ p["w1"] + p["b1"], 0.0)
    h2 = jnp.maximum(h1 @ p["w2"] + p["b2"], 0.0)
    return h2 @ p["w3"] + p["b3"]


if __name__ == "__main__":
    key = jax.random.PRNGKey(0)
    pkey, xkey1, xkey2 = jax.random.split(key, 3)
    params = init_params(pkey)
    prepped = prepare_params(params)   # weight prep hoisted out of the hot path

    # Small batch (state dim 2, as implied by fc1 = nn.Linear(2, 64)).
    # TODO(synk): at this size the kernel is pure fixed overhead; plain XLA
    # would match or beat Pallas, but the Pallas path is kept per the spec.
    B_small = 8
    x_small = jax.random.normal(xkey1, (B_small, 2), dtype=jnp.float32)
    out_small = jax.block_until_ready(qnetwork_forward(x_small, prepped))
    ref_small = reference_forward(x_small, params)
    assert out_small.shape == (B_small, 2)
    # bf16 MXU operands -> relaxed tolerance vs the f32 reference.
    assert jnp.allclose(out_small, ref_small, rtol=2e-2, atol=2e-2)

    # Larger batch exercising the batch grid + lane-padding path (grid=(2,)).
    B_big = 520
    x_big = jax.random.normal(xkey2, (B_big, 2), dtype=jnp.float32)
    out_big = jax.block_until_ready(qnetwork_forward(x_big, prepped))
    ref_big = reference_forward(x_big, params)
    assert out_big.shape == (B_big, 2)
    assert jnp.allclose(out_big, ref_big, rtol=2e-2, atol=2e-2)

    print("KERNEL_OK")
</pallas_src>

<mosaic_0001>
module attributes {stable_mosaic.version = 11 : i64} {
  func.func @qnet_kernel(%arg0: i32, %arg1: memref<2x128xf32, #tpu.memory_space<vmem>>, %arg2: memref<64x2xf32, #tpu.memory_space<vmem>>, %arg3: memref<64x1xf32, #tpu.memory_space<vmem>>, %arg4: memref<64x64xbf16, #tpu.memory_space<vmem>>, %arg5: memref<64x1xf32, #tpu.memory_space<vmem>>, %arg6: memref<8x64xbf16, #tpu.memory_space<vmem>>, %arg7: memref<8x1xf32, #tpu.memory_space<vmem>>, %arg8: memref<8x128xf32, #tpu.memory_space<vmem>>) attributes {dimension_semantics = [#tpu.dimension_semantics<parallel>], iteration_bounds = array<i64: 1>, scalar_prefetch = 0 : i64, scratch_operands = 0 : i64, tpu.core_type = #tpu.core_type<tc>, window_params = [{transform_indices = @transform_0, window_bounds = array<i64: 2, 128>}, {pipeline_mode = #tpu.pipeline_mode<synchronous>, transform_indices = @transform_1, window_bounds = array<i64: 64, 2>}, {pipeline_mode = #tpu.pipeline_mode<synchronous>, transform_indices = @transform_2, window_bounds = array<i64: 64, 1>}, {pipeline_mode = #tpu.pipeline_mode<synchronous>, transform_indices = @transform_3, window_bounds = array<i64: 64, 64>}, {pipeline_mode = #tpu.pipeline_mode<synchronous>, transform_indices = @transform_4, window_bounds = array<i64: 64, 1>}, {pipeline_mode = #tpu.pipeline_mode<synchronous>, transform_indices = @transform_5, window_bounds = array<i64: 8, 64>}, {pipeline_mode = #tpu.pipeline_mode<synchronous>, transform_indices = @transform_6, window_bounds = array<i64: 8, 1>}, {transform_indices = @transform_7, window_bounds = array<i64: 8, 128>}]} {
    %c0 = arith.constant 0 : index
    %c0_0 = arith.constant 0 : index
    %0 = vector.load %arg1[%c0, %c0_0] : memref<2x128xf32, #tpu.memory_space<vmem>>, vector<2x128xf32>
    %c0_1 = arith.constant 0 : index
    %c0_2 = arith.constant 0 : index
    %1 = vector.load %arg2[%c0_1, %c0_2] : memref<64x2xf32, #tpu.memory_space<vmem>>, vector<64x2xf32>
    %2 = vector.extract_strided_slice %1 {offsets = [0, 0], sizes = [64, 1], strides = [1, 1]} : vector<64x2xf32> to vector<64x1xf32>
    %3 = vector.extract_strided_slice %0 {offsets = [0, 0], sizes = [1, 128], strides = [1, 1]} : vector<2x128xf32> to vector<1x128xf32>
    %4 = vector.broadcast %2 : vector<64x1xf32> to vector<64x128xf32>
    %5 = vector.broadcast %3 : vector<1x128xf32> to vector<64x128xf32>
    %6 = arith.mulf %4, %5 : vector<64x128xf32>
    %7 = vector.extract_strided_slice %1 {offsets = [0, 1], sizes = [64, 1], strides = [1, 1]} : vector<64x2xf32> to vector<64x1xf32>
    %8 = vector.extract_strided_slice %0 {offsets = [1, 0], sizes = [1, 128], strides = [1, 1]} : vector<2x128xf32> to vector<1x128xf32>
    %9 = vector.broadcast %7 : vector<64x1xf32> to vector<64x128xf32>
    %10 = vector.broadcast %8 : vector<1x128xf32> to vector<64x128xf32>
    %11 = arith.mulf %9, %10 : vector<64x128xf32>
    %12 = arith.addf %6, %11 : vector<64x128xf32>
    %c0_3 = arith.constant 0 : index
    %c0_4 = arith.constant 0 : index
    %13 = vector.load %arg3[%c0_3, %c0_4] : memref<64x1xf32, #tpu.memory_space<vmem>>, vector<64x1xf32>
    %14 = vector.broadcast %13 : vector<64x1xf32> to vector<64x128xf32>
    %15 = arith.addf %12, %14 : vector<64x128xf32>
    %cst = arith.constant 0.000000e+00 : f32
    %16 = vector.broadcast %cst : f32 to vector<64x128xf32>
    %17 = arith.maximumf %15, %16 : vector<64x128xf32>
    %c0_5 = arith.constant 0 : index
    %c0_6 = arith.constant 0 : index
    %18 = vector.load %arg4[%c0_5, %c0_6] : memref<64x64xbf16, #tpu.memory_space<vmem>>, vector<64x64xbf16>
    %19 = arith.truncf %17 : vector<64x128xf32> to vector<64x128xbf16>
    %cst_7 = arith.constant dense<0.000000e+00> : vector<64x128xf32>
    %20 = tpu.matmul %18, %19, %cst_7 {dimension_numbers = #tpu.dot_dimension_numbers<[1], [0], [0], [1], [0, 0, 1, 1], [], []>} : vector<64x64xbf16>, vector<64x128xbf16>, vector<64x128xf32> -> vector<64x128xf32>
    %c0_8 = arith.constant 0 : index
    %c0_9 = arith.constant 0 : index
    %21 = vector.load %arg5[%c0_8, %c0_9] : memref<64x1xf32, #tpu.memory_space<vmem>>, vector<64x1xf32>
    %22 = vector.broadcast %21 : vector<64x1xf32> to vector<64x128xf32>
    %23 = arith.addf %20, %22 : vector<64x128xf32>
    %cst_10 = arith.constant 0.000000e+00 : f32
    %24 = vector.broadcast %cst_10 : f32 to vector<64x128xf32>
    %25 = arith.maximumf %23, %24 : vector<64x128xf32>
    %c0_11 = arith.constant 0 : index
    %c0_12 = arith.constant 0 : index
    %26 = vector.load %arg6[%c0_11, %c0_12] : memref<8x64xbf16, #tpu.memory_space<vmem>>, vector<8x64xbf16>
    %27 = arith.truncf %25 : vector<64x128xf32> to vector<64x128xbf16>
    %cst_13 = arith.constant dense<0.000000e+00> : vector<8x128xf32>
    %28 = tpu.matmul %26, %27, %cst_13 {dimension_numbers = #tpu.dot_dimension_numbers<[1], [0], [0], [1], [0, 0, 1, 1], [], []>} : vector<8x64xbf16>, vector<64x128xbf16>, vector<8x128xf32> -> vector<8x128xf32>
    %c0_14 = arith.constant 0 : index
    %c0_15 = arith.constant 0 : index
    %29 = vector.load %arg7[%c0_14, %c0_15] : memref<8x1xf32, #tpu.memory_space<vmem>>, vector<8x1xf32>
    %30 = vector.broadcast %29 : vector<8x1xf32> to vector<8x128xf32>
    %31 = arith.addf %28, %30 : vector<8x128xf32>
    %c0_16 = arith.constant 0 : index
    %c0_17 = arith.constant 0 : index
    %32 = vector.load %arg8[%c0_16, %c0_17] : memref<8x128xf32, #tpu.memory_space<vmem>>, vector<8x128xf32>
    tpu.vector_store %arg8[%c0_16, %c0_17], %31 {strides = array<i32>} : memref<8x128xf32, #tpu.memory_space<vmem>>, vector<8x128xf32>,
    return
  }
  func.func @transform_0(%arg0: i32) -> (i32, i32) {
    %c0_i32 = arith.constant 0 : i32
    %c0_i32_0 = arith.constant 0 : i32
    return %c0_i32, %arg0 : i32, i32
  }
  func.func @transform_1(%arg0: i32) -> (i32, i32) {
    %c0_i32 = arith.constant 0 : i32
    %c0_i32_0 = arith.constant 0 : i32
    %c0_i32_1 = arith.constant 0 : i32
    return %c0_i32, %c0_i32_0 : i32, i32
  }
  func.func @transform_2(%arg0: i32) -> (i32, i32) {
    %c0_i32 = arith.constant 0 : i32
    %c0_i32_0 = arith.constant 0 : i32
    %c0_i32_1 = arith.constant 0 : i32
    return %c0_i32, %c0_i32_0 : i32, i32
  }
  func.func @transform_3(%arg0: i32) -> (i32, i32) {
    %c0_i32 = arith.constant 0 : i32
    %c0_i32_0 = arith.constant 0 : i32
    %c0_i32_1 = arith.constant 0 : i32
    return %c0_i32, %c0_i32_0 : i32, i32
  }
  func.func @transform_4(%arg0: i32) -> (i32, i32) {
    %c0_i32 = arith.constant 0 : i32
    %c0_i32_0 = arith.constant 0 : i32
    %c0_i32_1 = arith.constant 0 : i32
    return %c0_i32, %c0_i32_0 : i32, i32
  }
  func.func @transform_5(%arg0: i32) -> (i32, i32) {
    %c0_i32 = arith.constant 0 : i32
    %c0_i32_0 = arith.constant 0 : i32
    %c0_i32_1 = arith.constant 0 : i32
    return %c0_i32, %c0_i32_0 : i32, i32
  }
  func.func @transform_6(%arg0: i32) -> (i32, i32) {
    %c0_i32 = arith.constant 0 : i32
    %c0_i32_0 = arith.constant 0 : i32
    %c0_i32_1 = arith.constant 0 : i32
    return %c0_i32, %c0_i32_0 : i32, i32
  }
  func.func @transform_7(%arg0: i32) -> (i32, i32) {
    %c0_i32 = arith.constant 0 : i32
    %c0_i32_0 = arith.constant 0 : i32
    return %c0_i32, %arg0 : i32, i32
  }
}

</mosaic_0001>

<llo_original>
// kernel: tpu_custom_call.1
$region0: #{tpu_custom_call.1}
  #allocation0 [shape = 'u32[]', space=smem, size = 0x4, offset = 0x4, fixed_abs, tag = 'smem constant byte address 0x4 - core index']
  #allocation1 [shape = 'u32[144,128]{1,0:T(1,128)}', space=vmem, size = 0x12000, scoped, tag = 'internal scratch']
  %s0 = inlined_call_operand.vmem [shape: f32[2,128], index: 0, kind: input, shape index: {}]
  %s1 = inlined_call_operand.vmem [shape: f32[64,2], index: 1, kind: input, shape index: {}]
  %s2 = inlined_call_operand.vmem [shape: f32[64,1], index: 2, kind: input, shape index: {}]
  %s3 = inlined_call_operand.vmem [shape: bf16[64,64], index: 3, kind: input, shape index: {}]
  %s4 = inlined_call_operand.vmem [shape: f32[64,1], index: 4, kind: input, shape index: {}]
  %s5 = inlined_call_operand.vmem [shape: bf16[8,64], index: 5, kind: input, shape index: {}]
  %s6 = inlined_call_operand.vmem [shape: f32[8,1], index: 6, kind: input, shape index: {}]
  %s7 = inlined_call_operand.hbm [shape: f32[8,128], index: 7, kind: output, shape index: {}]
  %s8 = sld [smem:[#allocation0]]
  $region38: #{tpu_custom_call.1} parent=0
    _
  %s10 = ssub.s32 1, %s8
  %s11 = scalar_select 0, %s10, %s8
  $region1: #{tpu_custom_call.1} parent=0
    #allocation2 [shape = 'u8[4096]{0}', space=vmem, size = 0x1000, scoped, tag = 'output window, operand 0, single buffered']
    #allocation3 [shape = 's32[1]{0}', space=sflag, size = 0x4, scoped, tag = 'scoped memory for tpu_custom_call.1']
    %12 = vsyncpa [#allocation3], 0
    // Predicated region
    $region2: #{tpu_custom_call.1} parent=1 // pred_check
      _
    $region3: #{tpu_custom_call.1} parent=1 // pred_check_branch
      %14 = sbr.rel (0) target = $region5
    $region4: #{tpu_custom_call.1} parent=1 // pred_region
      _
    $region5: #{tpu_custom_call.1} parent=1 // pred_fallthru
      _
    // Predicated region
    $region6: #{tpu_custom_call.1} parent=1 // pred_check
      _
    $region7: #{tpu_custom_call.1} parent=1 // pred_check_branch
      %16 = sbr.rel (0) target = $region9
    $region8: #{tpu_custom_call.1} parent=1 // pred_region
      _
    $region9: #{tpu_custom_call.1} parent=1 // pred_fallthru
      _
    // Predicated region
    $region10: #{tpu_custom_call.1} parent=1 // pred_check
      _
    $region11: #{tpu_custom_call.1} parent=1 // pred_check_branch
      %18 = sbr.rel (0) target = $region13
    $region12: #{tpu_custom_call.1} parent=1 // pred_region
      _
    $region13: #{tpu_custom_call.1} parent=1 // pred_fallthru
      _
    // Predicated region
    $region14: #{tpu_custom_call.1} parent=1 // pred_check
      _
    $region15: #{tpu_custom_call.1} parent=1 // pred_check_branch
      %20 = sbr.rel (0) target = $region17
    $region16: #{tpu_custom_call.1} parent=1 // pred_region
      _
    $region17: #{tpu_custom_call.1} parent=1 // pred_fallthru
      _
    // Predicated region
    $region18: #{tpu_custom_call.1} parent=1 // pred_check
      _
    $region19: #{tpu_custom_call.1} parent=1 // pred_check_branch
      %22 = sbr.rel (0) target = $region21
    $region20: #{tpu_custom_call.1} parent=1 // pred_region
      _
    $region21: #{tpu_custom_call.1} parent=1 // pred_fallthru
      _
    // Predicated region
    $region22: #{tpu_custom_call.1} parent=1 // pred_check
      _
    $region23: #{tpu_custom_call.1} parent=1 // pred_check_branch
      %24 = sbr.rel (0) target = $region25
    $region24: #{tpu_custom_call.1} parent=1 // pred_region
      _
    $region25: #{tpu_custom_call.1} parent=1 // pred_fallthru
      _
    // Predicated region
    $region26: #{tpu_custom_call.1} parent=1 // pred_check
      _
    $region27: #{tpu_custom_call.1} parent=1 // pred_check_branch
      %26 = sbr.rel (0) target = $region29
    $region28: #{tpu_custom_call.1} parent=1 // pred_region
      _
    $region29: #{tpu_custom_call.1} parent=1 // pred_fallthru
      _
    %v28 = vld [vmem:[%s0] sm:$0x3]
    %v29 = vld [vmem:[%s1] sm:$0xff]
    %v30 = vld [vmem:[%s1 + $0x8] sm:$0xff]
    %v31 = vld [vmem:[%s1 + $0x10] sm:$0xff]
    %v32 = vld [vmem:[%s1 + $0x18] sm:$0xff]
    %v33 = vld [vmem:[%s1 + $0x20] sm:$0xff]
    %v34 = vld [vmem:[%s1 + $0x28] sm:$0xff]
    %v35 = vld [vmem:[%s1 + $0x30] sm:$0xff]
    %v36 = vld [vmem:[%s1 + $0x38] sm:$0xff]
    %38 = vset.pattern.permute.xlu0 0
    %39 = vperm.xlu0 %38, %v29
    %v40 = vpop.permute.xlu0 %39
    %43 = vset.pattern.permute.xlu0 0
    %44 = vperm.xlu0 %43, %v30
    %v45 = vpop.permute.xlu0 %44
    %48 = vset.pattern.permute.xlu0 0
    %49 = vperm.xlu0 %48, %v31
    %v50 = vpop.permute.xlu0 %49
    %53 = vset.pattern.permute.xlu0 0
    %54 = vperm.xlu0 %53, %v32
    %v55 = vpop.permute.xlu0 %54
    %58 = vset.pattern.permute.xlu0 0
    %59 = vperm.xlu0 %58, %v33
    %v60 = vpop.permute.xlu0 %59
    %63 = vset.pattern.permute.xlu0 0
    %64 = vperm.xlu0 %63, %v34
    %v65 = vpop.permute.xlu0 %64
    %68 = vset.pattern.permute.xlu0 0
    %69 = vperm.xlu0 %68, %v35
    %v70 = vpop.permute.xlu0 %69
    %73 = vset.pattern.permute.xlu0 0
    %74 = vperm.xlu0 %73, %v36
    %v75 = vpop.permute.xlu0 %74
    %v77 = vlaneseq
    %v78 = vshrl.u32 %v77, 7
    %v79 = vsub.s32 0, %v78
    %v80 = vrot.slane %v28, %v79
    %v81 = vmul.f32 %v40, %v80
    %v82 = vmul.f32 %v45, %v80
    %v83 = vmul.f32 %v50, %v80
    %v84 = vmul.f32 %v55, %v80
    %v85 = vmul.f32 %v60, %v80
    %v86 = vmul.f32 %v65, %v80
    %v87 = vmul.f32 %v70, %v80
    %v88 = vmul.f32 %v75, %v80
    %89 = vset.pattern.permute.xlu0 1
    %90 = vperm.xlu0 %89, %v29
    %v91 = vpop.permute.xlu0 %90
    %93 = vset.pattern.permute.xlu0 1
    %94 = vperm.xlu0 %93, %v30
    %v95 = vpop.permute.xlu0 %94
    %97 = vset.pattern.permute.xlu0 1
    %98 = vperm.xlu0 %97, %v31
    %v99 = vpop.permute.xlu0 %98
    %101 = vset.pattern.permute.xlu0 1
    %102 = vperm.xlu0 %101, %v32
    %v103 = vpop.permute.xlu0 %102
    %105 = vset.pattern.permute.xlu0 1
    %106 = vperm.xlu0 %105, %v33
    %v107 = vpop.permute.xlu0 %106
    %109 = vset.pattern.permute.xlu0 1
    %110 = vperm.xlu0 %109, %v34
    %v111 = vpop.permute.xlu0 %110
    %113 = vset.pattern.permute.xlu0 1
    %114 = vperm.xlu0 %113, %v35
    %v115 = vpop.permute.xlu0 %114
    %117 = vset.pattern.permute.xlu0 1
    %118 = vperm.xlu0 %117, %v36
    %v119 = vpop.permute.xlu0 %118
    %v121 = vlaneseq
    %v122 = vshrl.u32 %v121, 7
    %v123 = vsub.s32 1, %v122
    %v124 = vrot.slane %v28, %v123
    %v125 = vmul.f32 %v91, %v124
    %v126 = vmul.f32 %v95, %v124
    %v127 = vmul.f32 %v99, %v124
    %v128 = vmul.f32 %v103, %v124
    %v129 = vmul.f32 %v107, %v124
    %v130 = vmul.f32 %v111, %v124
    %v131 = vmul.f32 %v115, %v124
    %v132 = vmul.f32 %v119, %v124
    %v133 = vadd.f32 %v81, %v125
    %v134 = vadd.f32 %v82, %v126
    %v135 = vadd.f32 %v83, %v127
    %v136 = vadd.f32 %v84, %v128
    %v137 = vadd.f32 %v85, %v129
    %v138 = vadd.f32 %v86, %v130
    %v139 = vadd.f32 %v87, %v131
    %v140 = vadd.f32 %v88, %v132
    %v141 = vld [vmem:[%s2] sm:$0xff]
    %v142 = vld [vmem:[%s2 + $0x8] sm:$0xff]
    %v143 = vld [vmem:[%s2 + $0x10] sm:$0xff]
    %v144 = vld [vmem:[%s2 + $0x18] sm:$0xff]
    %v145 = vld [vmem:[%s2 + $0x20] sm:$0xff]
    %v146 = vld [vmem:[%s2 + $0x28] sm:$0xff]
    %v147 = vld [vmem:[%s2 + $0x30] sm:$0xff]
    %v148 = vld [vmem:[%s2 + $0x38] sm:$0xff]
    %150 = vset.pattern.permute.xlu0 0
    %151 = vperm.xlu0 %150, %v141
    %v152 = vpop.permute.xlu0 %151
    %155 = vset.pattern.permute.xlu0 0
    %156 = vperm.xlu0 %155, %v142
    %v157 = vpop.permute.xlu0 %156
    %160 = vset.pattern.permute.xlu0 0
    %161 = vperm.xlu0 %160, %v143
    %v162 = vpop.permute.xlu0 %161
    %165 = vset.pattern.permute.xlu0 0
    %166 = vperm.xlu0 %165, %v144
    %v167 = vpop.permute.xlu0 %166
    %170 = vset.pattern.permute.xlu0 0
    %171 = vperm.xlu0 %170, %v145
    %v172 = vpop.permute.xlu0 %171
    %175 = vset.pattern.permute.xlu0 0
    %176 = vperm.xlu0 %175, %v146
    %v177 = vpop.permute.xlu0 %176
    %180 = vset.pattern.permute.xlu0 0
    %181 = vperm.xlu0 %180, %v147
    %v182 = vpop.permute.xlu0 %181
    %185 = vset.pattern.permute.xlu0 0
    %186 = vperm.xlu0 %185, %v148
    %v187 = vpop.permute.xlu0 %186
    %v189 = vadd.f32 %v133, %v152
    %v190 = vadd.f32 %v134, %v157
    %v191 = vadd.f32 %v135, %v162
    %v192 = vadd.f32 %v136, %v167
    %v193 = vadd.f32 %v137, %v172
    %v194 = vadd.f32 %v138, %v177
    %v195 = vadd.f32 %v139, %v182
    %v196 = vadd.f32 %v140, %v187
    %v197 = vmax.f32 %v189, 0.0
    %v198 = vmax.f32 %v190, 0.0
    %v199 = vmax.f32 %v191, 0.0
    %v200 = vmax.f32 %v192, 0.0
    %v201 = vmax.f32 %v193, 0.0
    %v202 = vmax.f32 %v194, 0.0
    %v203 = vmax.f32 %v195, 0.0
    %v204 = vmax.f32 %v196, 0.0
    %v205 = vld [vmem:[%s3] sm:$0xf]
    %v206 = vld [vmem:[%s3 + $0x4] sm:$0xf]
    %v207 = vld [vmem:[%s3 + $0x8] sm:$0xf]
    %v208 = vld [vmem:[%s3 + $0xc] sm:$0xf]
    %v209 = vld [vmem:[%s3 + $0x10] sm:$0xf]
    %v210 = vld [vmem:[%s3 + $0x14] sm:$0xf]
    %v211 = vld [vmem:[%s3 + $0x18] sm:$0xf]
    %v212 = vld [vmem:[%s3 + $0x1c] sm:$0xf]
    %v213 = vpack.c.bf16 %v198, %v197
    %v214 = vpack.c.bf16 %v200, %v199
    %v215 = vpack.c.bf16 %v202, %v201
    %v216 = vpack.c.bf16 %v204, %v203
    %v217 = vld [vmem:[%s4] sm:$0xff]
    %v218 = vld [vmem:[%s4 + $0x8] sm:$0xff]
    %v219 = vld [vmem:[%s4 + $0x10] sm:$0xff]
    %v220 = vld [vmem:[%s4 + $0x18] sm:$0xff]
    %v221 = vld [vmem:[%s4 + $0x20] sm:$0xff]
    %v222 = vld [vmem:[%s4 + $0x28] sm:$0xff]
    %v223 = vld [vmem:[%s4 + $0x30] sm:$0xff]
    %v224 = vld [vmem:[%s4 + $0x38] sm:$0xff]
    %226 = vset.pattern.permute.xlu0 0
    %227 = vperm.xlu0 %226, %v217
    %v228 = vpop.permute.xlu0 %227
    %231 = vset.pattern.permute.xlu0 0
    %232 = vperm.xlu0 %231, %v218
    %v233 = vpop.permute.xlu0 %232
    %236 = vset.pattern.permute.xlu0 0
    %237 = vperm.xlu0 %236, %v219
    %v238 = vpop.permute.xlu0 %237
    %241 = vset.pattern.permute.xlu0 0
    %242 = vperm.xlu0 %241, %v220
    %v243 = vpop.permute.xlu0 %242
    %246 = vset.pattern.permute.xlu0 0
    %247 = vperm.xlu0 %246, %v221
    %v248 = vpop.permute.xlu0 %247
    %251 = vset.pattern.permute.xlu0 0
    %252 = vperm.xlu0 %251, %v222
    %v253 = vpop.permute.xlu0 %252
    %256 = vset.pattern.permute.xlu0 0
    %257 = vperm.xlu0 %256, %v223
    %v258 = vpop.permute.xlu0 %257
    %261 = vset.pattern.permute.xlu0 0
    %262 = vperm.xlu0 %261, %v224
    %v263 = vpop.permute.xlu0 %262
    %v273 = vunpack.c.l.b16 %v205
    %v274 = vunpack.c.l.b16 %v206
    %v275 = vunpack.c.l.b16 %v207
    %v276 = vunpack.c.l.b16 %v208
    %v277 = vunpack.c.l.b16 %v209
    %v278 = vunpack.c.l.b16 %v210
    %v279 = vunpack.c.l.b16 %v211
    %v280 = vunpack.c.l.b16 %v212
    %v281 = vpack.c.b16 %v274, %v273
    %v282 = vpack.c.b16 %v276, %v275
    %v283 = vpack.c.b16 %v278, %v277
    %v284 = vpack.c.b16 %v280, %v279
    %vm285 = vcmask 523264
    %v287 = vsel %vm285, %v281, 0
    %v290 = vsel %vm285, %v282, 0
    %v293 = vsel %vm285, %v283, 0
    %v296 = vsel %vm285, %v284, 0
    %298 = vmatprep.subr.bf16.mxu0 0
    %299 = vmatpush1.bf16.msra.mxu0 %v213
    %300 = vmatprep.subr.bf16.mxu0 0
    %301 = vmatpush1.bf16.msra.mxu0 %v214
    %302 = vmatprep.subr.bf16.mxu0 0
    %303 = vmatpush1.bf16.msra.mxu0 %v215
    %304 = vmatprep.subr.bf16.mxu0 0
    %305 = vmatpush1.bf16.msra.mxu0 %v216
    %306 = vmatprep.subr.bf16.mxu0 0
    %307 = vmatpush1.bf16.msra.mxu0 0
    %308 = vmatprep.subr.bf16.mxu0 0
    %309 = vmatpush1.bf16.msra.mxu0 0
    %310 = vmatprep.subr.bf16.mxu0 0
    %311 = vmatpush1.bf16.msra.mxu0 0
    %312 = vmatprep.subr.bf16.mxu0 0
    %313 = vmatpush1.bf16.msra.mxu0 0
    %314 = vmatprep.subr.bf16.mxu0 0
    %315 = vmatpush1.bf16.msra.mxu0 0
    %316 = vmatprep.subr.bf16.mxu0 0
    %317 = vmatpush1.bf16.msra.mxu0 0
    %318 = vmatprep.subr.bf16.mxu0 0
    %319 = vmatpush1.bf16.msra.mxu0 0
    %320 = vmatprep.subr.bf16.mxu0 0
    %321 = vmatpush1.bf16.msra.mxu0 0
    %322 = vmatprep.subr.bf16.mxu0 0
    %323 = vmatpush1.bf16.msra.mxu0 0
    %324 = vmatprep.subr.bf16.mxu0 0
    %325 = vmatpush1.bf16.msra.mxu0 0
    %326 = vmatprep.subr.bf16.mxu0 0
    %327 = vmatpush1.bf16.msra.mxu0 0
    %328 = vmatprep.subr.bf16.mxu0 0
    %329 = vmatpush1.bf16.msra.mxu0 0
    %330 = vmatprep.mubr.bf16.mxu0 0
    %331 = vmatmul.mubr.bf16.gmra.mrb[0].mxu0 %v287
    %v332 = vpop.f32.mrb[0].mxu0
    %v333 = vadd.f32 %v228, %v332
    %v334 = vpop.f32.mrb[0].mxu0
    %v335 = vpop.f32.mrb[0].mxu0
    %v336 = vadd.f32 %v233, %v335
    %v337 = vpop.f32.mrb[0].mxu0
    %338 = vmatprep.mubr.bf16.mxu0 0
    %339 = vmatmul.mubr.bf16.gmra.mrb[0].mxu0 %v290
    %v340 = vpop.f32.mrb[0].mxu0
    %v341 = vadd.f32 %v238, %v340
    %v342 = vpop.f32.mrb[0].mxu0
    %v343 = vpop.f32.mrb[0].mxu0
    %v344 = vadd.f32 %v243, %v343
    %v345 = vpop.f32.mrb[0].mxu0
    %346 = vmatprep.mubr.bf16.mxu0 0
    %347 = vmatmul.mubr.bf16.gmra.mrb[0].mxu0 %v293
    %v348 = vpop.f32.mrb[0].mxu0
    %v349 = vadd.f32 %v248, %v348
    %v350 = vpop.f32.mrb[0].mxu0
    %v351 = vpop.f32.mrb[0].mxu0
    %v352 = vadd.f32 %v253, %v351
    %v353 = vpop.f32.mrb[0].mxu0
    %354 = vmatprep.mubr.bf16.mxu0 0
    %355 = vmatmul.mubr.bf16.gmra.mrb[0].mxu0 %v296
    %v356 = vpop.f32.mrb[0].mxu0
    %v357 = vadd.f32 %v258, %v356
    %v358 = vpop.f32.mrb[0].mxu0
    %v359 = vpop.f32.mrb[0].mxu0
    %v360 = vadd.f32 %v263, %v359
    %v361 = vpop.f32.mrb[0].mxu0
    %362 = vdwg.mxu0
    %v363 = vmax.f32 %v333, 0.0
    %v364 = vmax.f32 %v336, 0.0
    %v365 = vmax.f32 %v341, 0.0
    %v366 = vmax.f32 %v344, 0.0
    %v367 = vmax.f32 %v349, 0.0
    %v368 = vmax.f32 %v352, 0.0
    %v369 = vmax.f32 %v357, 0.0
    %v370 = vmax.f32 %v360, 0.0
    %v371 = vld [vmem:[%s5] sm:$0xf]
    %v372 = vpack.c.bf16 %v364, %v363
    %v373 = vpack.c.bf16 %v366, %v365
    %v374 = vpack.c.bf16 %v368, %v367
    %v375 = vpack.c.bf16 %v370, %v369
    %v376 = vld [vmem:[%s6] sm:$0xff]
    %378 = vset.pattern.permute.xlu0 0
    %379 = vperm.xlu0 %378, %v376
    %v380 = vpop.permute.xlu0 %379
    %v383 = vsel %vm285, %v371, 0
    %385 = vmatprep.subr.bf16.mxu0 0
    %386 = vmatpush1.bf16.msra.mxu0 %v372
    %387 = vmatprep.subr.bf16.mxu0 0
    %388 = vmatpush1.bf16.msra.mxu0 %v373
    %389 = vmatprep.subr.bf16.mxu0 0
    %390 = vmatpush1.bf16.msra.mxu0 %v374
    %391 = vmatprep.subr.bf16.mxu0 0
    %392 = vmatpush1.bf16.msra.mxu0 %v375
    %393 = vmatprep.subr.bf16.mxu0 0
    %394 = vmatpush1.bf16.msra.mxu0 0
    %395 = vmatprep.subr.bf16.mxu0 0
    %396 = vmatpush1.bf16.msra.mxu0 0
    %397 = vmatprep.subr.bf16.mxu0 0
    %398 = vmatpush1.bf16.msra.mxu0 0
    %399 = vmatprep.subr.bf16.mxu0 0
    %400 = vmatpush1.bf16.msra.mxu0 0
    %401 = vmatprep.subr.bf16.mxu0 0
    %402 = vmatpush1.bf16.msra.mxu0 0
    %403 = vmatprep.subr.bf16.mxu0 0
    %404 = vmatpush1.bf16.msra.mxu0 0
    %405 = vmatprep.subr.bf16.mxu0 0
    %406 = vmatpush1.bf16.msra.mxu0 0
    %407 = vmatprep.subr.bf16.mxu0 0
    %408 = vmatpush1.bf16.msra.mxu0 0
    %409 = vmatprep.subr.bf16.mxu0 0
    %410 = vmatpush1.bf16.msra.mxu0 0
    %411 = vmatprep.subr.bf16.mxu0 0
    %412 = vmatpush1.bf16.msra.mxu0 0
    %413 = vmatprep.subr.bf16.mxu0 0
    %414 = vmatpush1.bf16.msra.mxu0 0
    %415 = vmatprep.subr.bf16.mxu0 0
    %416 = vmatpush1.bf16.msra.mxu0 0
    %417 = vmatprep.mubr.bf16.mxu0 0
    %418 = vmatmul.mubr.bf16.gmra.mrb[0].mxu0 %v383
    %v419 = vpop.f32.mrb[0].mxu0
    %v420 = vadd.f32 %v380, %v419
    %v421 = vpop.f32.mrb[0].mxu0
    %v422 = vpop.f32.mrb[0].mxu0
    %v423 = vpop.f32.mrb[0].mxu0
    %424 = vdwg.mxu0
    %425 = vst [vmem:[#allocation2] sm:$0xff] %v420
    // Predicated region
    $region30: #{tpu_custom_call.1} parent=1 // pred_check
      _
    $region31: #{tpu_custom_call.1} parent=1 // pred_check_branch
      %427 = sbr.rel (0) target = $region33
    $region32: #{tpu_custom_call.1} parent=1 // pred_region
      %s429 = ssub.s32 128, 128
      %430 = vsyncadd [#allocation3], %s429
      %s432 = sshll.u32 [#allocation2], 4
      %s433 = int_to_ptr.vmem [resolvable:$true] %s432
      %435 = dma.vmem_to_hbm [thread:$0]  %s433, 128, %s7, [#allocation3]
    $region33: #{tpu_custom_call.1} parent=1 // pred_fallthru
      _
    // Predicated region
    $region34: #{tpu_custom_call.1} parent=1 // pred_check
      _
    $region35: #{tpu_custom_call.1} parent=1 // pred_check_branch
      %437 = sbr.rel (0) target = $region37
    $region36: #{tpu_custom_call.1} parent=1 // pred_region
      %438 = dma.done [#allocation3], 128
    $region37: #{tpu_custom_call.1} parent=1 // pred_fallthru
      _
    %439 = vsyncpa [#allocation3], 1

</llo_original>
